<compile_context>
chip_gen: v6e
topology: v6e:2x2x1
jax: 0.10.0
libtpu: 0.0.40
codegen_flags: <defaults>
</compile_context>

<pallas_src>
import jax
import jax.numpy as jnp
from jax.experimental import pallas as pl
from jax.experimental.pallas import tpu as pltpu


def _make_attention_kernel(S, S_pad):
    """Kernel factory (S / S_pad are static).

    Refs:
      x_ref   : (TB, S, H)   block of lstm_output
      w_ref   : (1, H)       projection weight, lane-friendly row layout (resident)
      ctx_ref : (TB, H)      context output block (dense 2-D)
      sw_ref  : (TB, S_pad)  softmax attention-weights output block (lane-dense)
    """

    def kernel(x_ref, w_ref, ctx_ref, sw_ref):
        w = w_ref[...]  # (1, H), float32

        # ---- Pass 1: scores (TB, S) = <x, w> over H (VPU mul + lane reduce). ----
        scores = jnp.sum(x_ref[...].astype(jnp.float32) * w[None, :, :], axis=-1)

        # Pad the sequence (lane) axis with -inf so the softmax / output store is
        # full-width and lane-dense; padded lanes produce exactly 0 weight.
        if S_pad != S:
            pad = jnp.full((scores.shape[0], S_pad - S), -jnp.inf, dtype=scores.dtype)
            scores = jnp.concatenate([scores, pad], axis=-1)      # (TB, S_pad)

        # ---- Softmax over the sequence axis (exact normalization). ----
        m = jnp.max(scores, axis=-1, keepdims=True)               # (TB, 1)
        e = jnp.exp(scores - m)                                   # (TB, S_pad)
        p = e / jnp.sum(e, axis=-1, keepdims=True)                # (TB, S_pad)
        sw_ref[...] = p.astype(sw_ref.dtype)

        # ---- Pass 2: context (TB, H) = sum_s p[:, s] * x[:, s, :]. ----
        p_real = p[:, :S] if S_pad != S else p                    # (TB, S)
        ctx = jnp.sum(p_real[:, :, None] * x_ref[...].astype(jnp.float32), axis=1)
        ctx_ref[...] = ctx.astype(ctx_ref.dtype)

    return kernel


def _choose_tiling(B, S, S_pad, H, in_itemsize, out_itemsize):
    """Pick the batch-block size and an explicit VMEM budget.

    The kernel is a pure HBM-streaming workload, so the block should be as big
    as the scoped-VMEM budget allows (amortize the ~0.35us/step overhead), while
    v7x additionally keeps >= 4 grid steps so each of its 2 TensorCores still
    has >= 2 pipelined steps.
    """
    is_v7x = False
    try:
        kind = jax.devices()[0].device_kind.lower()
        is_v7x = "v7" in kind
    except Exception:
        pass

    # Target bytes of *input* streamed per grid step.
    target = (6 << 20) if is_v7x else (8 << 20)   # v7x has 64 MiB VMEM vs 128 MiB
    per_row = max(1, S * H * in_itemsize)
    tb = max(1, target // per_row)

    if is_v7x and B >= 4:
        # Grid is sharded over 2 TensorCores; keep >= 2 pipelined steps per core.
        tb = min(tb, B // 4)

    tb = max(1, min(tb, B))
    # Keep the 2-D output blocks sublane-friendly: tb is either the full batch
    # or a multiple of 8.
    if tb < B:
        tb = min(B, max(8, (tb // 8) * 8))
    tb = int(tb)

    # Explicit VMEM budget: double-buffered in/out blocks + f32 intermediates.
    in_block = tb * S * H * in_itemsize
    out_blocks = tb * H * out_itemsize + tb * S_pad * out_itemsize
    interm = (tb * S * H * 4          # transient f32 product for the lane reduce
              + 4 * tb * S_pad * 4    # scores / e / p / p_real (f32)
              + tb * H * 4)           # f32 context before the final cast
    vmem = 2 * (in_block + out_blocks) + interm + (2 << 20)
    vmem = max(vmem, 32 << 20)                        # never go below the defaults
    vmem = min(vmem, (48 << 20) if is_v7x else (96 << 20))
    return tb, int(vmem)


def attention_forward(lstm_output, attn_weight, attn_bias=None):
    """lstm_output: (B, S, H)
       attn_weight: (1, H)   (PyTorch nn.Linear(H, 1) weight layout)
       attn_bias:   (1,)     unused: softmax / context are invariant to the
                             constant per-row shift it induces.
       returns (context (B, 1, H), soft_attn_weights (B, S))
    """
    del attn_bias  # mathematically a no-op for both returned outputs
    B, S, H = lstm_output.shape
    w = attn_weight.reshape(1, H).astype(jnp.float32)  # lane-friendly resident row

    S_pad = -(-S // 128) * 128                         # lane-dense soft-weight slab
    itemsize = jnp.dtype(lstm_output.dtype).itemsize
    tb, vmem_limit = _choose_tiling(B, S, S_pad, H, itemsize, itemsize)
    grid = (pl.cdiv(B, tb),)

    grid_spec = pltpu.PrefetchScalarGridSpec(
        num_scalar_prefetch=0,
        grid=grid,
        in_specs=[
            pl.BlockSpec((tb, S, H), lambda i: (i, 0, 0)),   # lstm_output block
            pl.BlockSpec((1, H), lambda i: (0, 0)),          # weight (resident)
        ],
        out_specs=[
            pl.BlockSpec((tb, H), lambda i: (i, 0)),         # context (dense 2-D)
            pl.BlockSpec((tb, S_pad), lambda i: (i, 0)),     # soft weights (lane-dense)
        ],
    )

    context2d, soft_pad = pl.pallas_call(
        _make_attention_kernel(S, S_pad),
        out_shape=(
            jax.ShapeDtypeStruct((B, H), lstm_output.dtype),
            jax.ShapeDtypeStruct((B, S_pad), lstm_output.dtype),
        ),
        grid_spec=grid_spec,
        compiler_params=pltpu.CompilerParams(
            dimension_semantics=("parallel",),
            vmem_limit_bytes=vmem_limit,
        ),
    )(lstm_output, w)

    context = context2d[:, None, :]                    # (B, 1, H) — reshape in wrapper
    soft = soft_pad[:, :S] if S_pad != S else soft_pad
    return context, soft


def _reference(lstm_output, attn_weight, attn_bias):
    scores = jnp.einsum("bsh,oh->bso", lstm_output, attn_weight) + attn_bias
    scores = scores[..., 0]                                    # (B, S)
    soft = jax.nn.softmax(scores, axis=1)                      # (B, S)
    ctx = jnp.einsum("bs,bsh->bh", soft, lstm_output)[:, None, :]
    return ctx, soft


if __name__ == "__main__":
    B, S, H = 2, 8, 32
    key = jax.random.PRNGKey(0)
    k_x, k_w, k_b = jax.random.split(key, 3)

    lstm_output = jax.random.normal(k_x, (B, S, H), dtype=jnp.float32)
    # Deterministic "Linear(H, 1)" parameters (PyTorch layout: weight (1, H), bias (1,))
    attn_weight = jax.random.normal(k_w, (1, H), dtype=jnp.float32) * 0.1
    attn_bias = jax.random.normal(k_b, (1,), dtype=jnp.float32) * 0.1

    ctx, soft = attention_forward(lstm_output, attn_weight, attn_bias)
    jax.block_until_ready((ctx, soft))

    ctx_ref, soft_ref = _reference(lstm_output, attn_weight, attn_bias)
    assert ctx.shape == (B, 1, H) and soft.shape == (B, S)
    assert jnp.allclose(ctx, ctx_ref, atol=1e-5, rtol=1e-5)
    assert jnp.allclose(soft, soft_ref, atol=1e-5, rtol=1e-5)

    print("KERNEL_OK")
</pallas_src>

<mosaic_0001>
module attributes {stable_mosaic.version = 11 : i64} {
  func.func @kernel(%arg0: i32, %arg1: memref<2x8x32xf32, #tpu.memory_space<vmem>>, %arg2: memref<1x32xf32, #tpu.memory_space<vmem>>, %arg3: memref<2x32xf32, #tpu.memory_space<vmem>>, %arg4: memref<2x128xf32, #tpu.memory_space<vmem>>) attributes {dimension_semantics = [#tpu.dimension_semantics<parallel>], iteration_bounds = array<i64: 1>, scalar_prefetch = 0 : i64, scratch_operands = 0 : i64, tpu.core_type = #tpu.core_type<tc>, window_params = [{transform_indices = @transform_0, window_bounds = array<i64: 2, 8, 32>}, {pipeline_mode = #tpu.pipeline_mode<synchronous>, transform_indices = @transform_1, window_bounds = array<i64: 1, 32>}, {transform_indices = @transform_2, window_bounds = array<i64: 2, 32>}, {transform_indices = @transform_3, window_bounds = array<i64: 2, 128>}]} {
    %c0 = arith.constant 0 : index
    %c0_0 = arith.constant 0 : index
    %0 = vector.load %arg2[%c0, %c0_0] : memref<1x32xf32, #tpu.memory_space<vmem>>, vector<1x32xf32>
    %c0_1 = arith.constant 0 : index
    %c0_2 = arith.constant 0 : index
    %c0_3 = arith.constant 0 : index
    %1 = vector.load %arg1[%c0_1, %c0_2, %c0_3] : memref<2x8x32xf32, #tpu.memory_space<vmem>>, vector<2x8x32xf32>
    %2 = vector.shape_cast %0 : vector<1x32xf32> to vector<1x1x32xf32>
    %3 = vector.broadcast %2 : vector<1x1x32xf32> to vector<2x8x32xf32>
    %4 = arith.mulf %1, %3 : vector<2x8x32xf32>
    %cst = arith.constant dense<0.000000e+00> : vector<2x8xf32>
    %5 = vector.multi_reduction <add>, %4, %cst [2] : vector<2x8x32xf32> to vector<2x8xf32>
    %cst_4 = arith.constant 0xFF800000 : f32
    %6 = vector.broadcast %cst_4 : f32 to vector<2x120xf32>
    %7 = tpu.concatenate %5, %6 in 1 : vector<2x8xf32>, vector<2x120xf32> -> vector<2x128xf32>
    %cst_5 = arith.constant dense<0xFF800000> : vector<2xf32>
    %8 = vector.multi_reduction <maximumf>, %7, %cst_5 [1] : vector<2x128xf32> to vector<2xf32>
    %9 = vector.shape_cast %8 : vector<2xf32> to vector<2x1xf32>
    %10 = vector.broadcast %9 : vector<2x1xf32> to vector<2x128xf32>
    %11 = arith.subf %7, %10 : vector<2x128xf32>
    %12 = math.exp %11 : vector<2x128xf32>
    %cst_6 = arith.constant dense<0.000000e+00> : vector<2xf32>
    %13 = vector.multi_reduction <add>, %12, %cst_6 [1] : vector<2x128xf32> to vector<2xf32>
    %14 = vector.shape_cast %13 : vector<2xf32> to vector<2x1xf32>
    %15 = vector.broadcast %14 : vector<2x1xf32> to vector<2x128xf32>
    %16 = arith.divf %12, %15 : vector<2x128xf32>
    %c0_7 = arith.constant 0 : index
    %c0_8 = arith.constant 0 : index
    %17 = vector.load %arg4[%c0_7, %c0_8] : memref<2x128xf32, #tpu.memory_space<vmem>>, vector<2x128xf32>
    tpu.vector_store %arg4[%c0_7, %c0_8], %16 {strides = array<i32>} : memref<2x128xf32, #tpu.memory_space<vmem>>, vector<2x128xf32>,
    %18 = vector.extract_strided_slice %16 {offsets = [0, 0], sizes = [2, 8], strides = [1, 1]} : vector<2x128xf32> to vector<2x8xf32>
    %19 = vector.shape_cast %18 : vector<2x8xf32> to vector<2x8x1xf32>
    %c0_9 = arith.constant 0 : index
    %c0_10 = arith.constant 0 : index
    %c0_11 = arith.constant 0 : index
    %20 = vector.load %arg1[%c0_9, %c0_10, %c0_11] : memref<2x8x32xf32, #tpu.memory_space<vmem>>, vector<2x8x32xf32>
    %21 = vector.broadcast %19 : vector<2x8x1xf32> to vector<2x8x32xf32>
    %22 = arith.mulf %21, %20 : vector<2x8x32xf32>
    %cst_12 = arith.constant dense<0.000000e+00> : vector<2x32xf32>
    %23 = vector.multi_reduction <add>, %22, %cst_12 [1] : vector<2x8x32xf32> to vector<2x32xf32>
    %c0_13 = arith.constant 0 : index
    %c0_14 = arith.constant 0 : index
    %24 = vector.load %arg3[%c0_13, %c0_14] : memref<2x32xf32, #tpu.memory_space<vmem>>, vector<2x32xf32>
    tpu.vector_store %arg3[%c0_13, %c0_14], %23 {strides = array<i32>} : memref<2x32xf32, #tpu.memory_space<vmem>>, vector<2x32xf32>,
    return
  }
  func.func @transform_0(%arg0: i32) -> (i32, i32, i32) {
    %c0_i32 = arith.constant 0 : i32
    %c0_i32_0 = arith.constant 0 : i32
    %c0_i32_1 = arith.constant 0 : i32
    return %arg0, %c0_i32, %c0_i32_0 : i32, i32, i32
  }
  func.func @transform_1(%arg0: i32) -> (i32, i32) {
    %c0_i32 = arith.constant 0 : i32
    %c0_i32_0 = arith.constant 0 : i32
    %c0_i32_1 = arith.constant 0 : i32
    return %c0_i32, %c0_i32_0 : i32, i32
  }
  func.func @transform_2(%arg0: i32) -> (i32, i32) {
    %c0_i32 = arith.constant 0 : i32
    %c0_i32_0 = arith.constant 0 : i32
    return %arg0, %c0_i32 : i32, i32
  }
  func.func @transform_3(%arg0: i32) -> (i32, i32) {
    %c0_i32 = arith.constant 0 : i32
    %c0_i32_0 = arith.constant 0 : i32
    return %arg0, %c0_i32 : i32, i32
  }
}

</mosaic_0001>

<llo_original>
// kernel: tpu_custom_call.1
$region0: #{tpu_custom_call.1}
  #allocation0 [shape = 'u32[]', space=smem, size = 0x4, offset = 0x4, fixed_abs, tag = 'smem constant byte address 0x4 - core index']
  #allocation1 [shape = 'u32[144,128]{1,0:T(1,128)}', space=vmem, size = 0x12000, scoped, tag = 'internal scratch']
  %s0 = inlined_call_operand.hbm [shape: f32[2,8,32], index: 0, kind: input, shape index: {}]
  %s1 = inlined_call_operand.vmem [shape: f32[1,32], index: 1, kind: input, shape index: {}]
  %s2 = inlined_call_operand.hbm [shape: f32[2,32], index: 2, kind: output, shape index: {0}]
  %s3 = inlined_call_operand.hbm [shape: f32[2,128], index: 3, kind: output, shape index: {1}]
  %4 = xla_tuple %s2, %s3
  %s5 = sld [smem:[#allocation0]]
  $region30: #{tpu_custom_call.1} parent=0
    _
  %s7 = ssub.s32 1, %s5
  %s8 = scalar_select 0, %s7, %s5
  $region1: #{tpu_custom_call.1} parent=0
    #allocation2 [shape = 'u8[8192]{0}', space=vmem, size = 0x2000, scoped, tag = 'input window, operand 0, single buffered']
    #allocation3 [shape = 's32[1]{0}', space=sflag, size = 0x4, scoped, tag = 'scoped memory for tpu_custom_call.1']
    #allocation4 [shape = 's32[1]{0}', space=sflag, size = 0x4, scoped, tag = 'scoped memory for tpu_custom_call.1']
    #allocation5 [shape = 'u8[1024]{0}', space=vmem, size = 0x400, scoped, tag = 'output window, operand 0, single buffered']
    #allocation6 [shape = 'u8[1024]{0}', space=vmem, size = 0x400, scoped, tag = 'output window, operand 1, single buffered']
    #allocation7 [shape = 's32[1]{0}', space=sflag, size = 0x4, scoped, tag = 'scoped memory for tpu_custom_call.1']
    %9 = vsyncpa [#allocation3], 0
    %10 = vsyncpa [#allocation4], 0
    %11 = vsyncpa [#allocation7], 0
    // Predicated region
    $region2: #{tpu_custom_call.1} parent=1 // pred_check
      _
    $region3: #{tpu_custom_call.1} parent=1 // pred_check_branch
      %13 = sbr.rel (0) target = $region5
    $region4: #{tpu_custom_call.1} parent=1 // pred_region
      %s15 = ssub.s32 256, 256
      %16 = vsyncadd [#allocation3], %s15
      %s17 = sshll.u32 [#allocation2], 4
      %s18 = int_to_ptr.vmem [resolvable:$true] %s17
      %23 = dma.hbm_to_vmem [thread:$0]  %s0, 256, %s18, [#allocation3], 128, 128, 8
    $region5: #{tpu_custom_call.1} parent=1 // pred_fallthru
      _
    // Predicated region
    $region6: #{tpu_custom_call.1} parent=1 // pred_check
      _
    $region7: #{tpu_custom_call.1} parent=1 // pred_check_branch
      %25 = sbr.rel (0) target = $region9
    $region8: #{tpu_custom_call.1} parent=1 // pred_region
      _
    $region9: #{tpu_custom_call.1} parent=1 // pred_fallthru
      _
    // Predicated region
    $region10: #{tpu_custom_call.1} parent=1 // pred_check
      _
    $region11: #{tpu_custom_call.1} parent=1 // pred_check_branch
      %27 = sbr.rel (0) target = $region13
    $region12: #{tpu_custom_call.1} parent=1 // pred_region
      %28 = dma.done [#allocation3], 256
    $region13: #{tpu_custom_call.1} parent=1 // pred_fallthru
      _
    %v29 = vld [vmem:[%s1] sm:$0x1]
    %v30 = vld [vmem:[#allocation2] sm:$0xff]
    %v31 = vld [vmem:[#allocation2 + $0x8] sm:$0xff]
    %v33 = vlaneseq
    %v34 = vshrl.u32 %v33, 7
    %v35 = vsub.s32 0, %v34
    %v36 = vrot.slane %v29, %v35
    %v38 = vmul.f32 %v30, %v36
    %v39 = vmul.f32 %v31, %v36
    %vm40 = vcmask 261120
    %v41 = vsel %vm40, %v38, 0.0
    %42 = vadd.xlane.f32.xlu0 %v41
    %v43 = vpop.xlane.xlu0 %42
    %v44 = vsel %vm40, %v39, 0.0
    %45 = vadd.xlane.f32.xlu0 %v44
    %v46 = vpop.xlane.xlu0 %45
    %v49 = vlaneseq
    %v50 = vand.u32 %v49, 127
    %v51 = vlaneseq
    %v52 = vshrl.u32 %v51, 7
    %v53 = vsub.s32 %v50, %v52
    %v54 = vrot.slane %v43, %v53
    %v55 = vlaneseq
    %v56 = vshrl.u32 %v55, 7
    %v57 = vsub.s32 %v50, %v56
    %v58 = vrot.slane %v46, %v57
    %vm59 = vcmask 1041409
    %v60 = vsel %vm59, %v58, %v54
    %vm62 = vcmask 64512
    %v63 = vsel %vm62, %v60, -inf
    %vm64 = vcmask 1041408
    %v65 = vsel %vm64, %v63, -inf
    %66 = vmax.xlane.f32.xlu0 %v65
    %v67 = vpop.xlane.xlu0 %66
    %v68 = vsub.f32 %v63, %v67
    %v69 = vmul.f32 %v68, 1.442695
    %v70 = vpow.pop %v69
    %v71 = vsel %vm64, %v70, 0.0
    %72 = vadd.xlane.f32.xlu0 %v71
    %v73 = vpop.xlane.xlu0 %72
    %v74 = vrcp.pop %v73
    %v75 = vmul.f32 %v70, %v74
    %76 = vst [vmem:[#allocation6] sm:$0x3] %v75
    %v77 = vlaneseq
    %v78 = vshrl.u32 %v77, 7
    %v79 = vsub.s32 0, %v78
    %v80 = vrot.slane %v75, %v79
    %82 = vbcast.lane.b32.xlu0 %v80, 256
    %v83 = vpop.permute.xlu0 %82
    %v84 = vlaneseq
    %v85 = vshrl.u32 %v84, 7
    %v86 = vsub.s32 1, %v85
    %v87 = vrot.slane %v75, %v86
    %89 = vbcast.lane.b32.xlu0 %v87, 256
    %v90 = vpop.permute.xlu0 %89
    %v91 = vld [vmem:[#allocation2] sm:$0xff]
    %v92 = vld [vmem:[#allocation2 + $0x8] sm:$0xff]
    %v93 = vmul.f32 %v83, %v91
    %v94 = vmul.f32 %v90, %v92
    %v95 = vsel %vm40, %v93, 0.0
    %v96 = vrot.slane %v95, 4
    %v97 = vadd.f32 %v95, %v96
    %v98 = vrot.slane %v97, 2
    %v99 = vadd.f32 %v97, %v98
    %v100 = vrot.slane %v99, 1
    %v101 = vadd.f32 %v99, %v100
    %v102 = vsel %vm40, %v94, 0.0
    %v103 = vrot.slane %v102, 4
    %v104 = vadd.f32 %v102, %v103
    %v105 = vrot.slane %v104, 2
    %v106 = vadd.f32 %v104, %v105
    %v107 = vrot.slane %v106, 1
    %v108 = vadd.f32 %v106, %v107
    %v111 = vsel %vm59, %v108, %v101
    %vm113 = vcmask 254976
    %114 = vst.msk [vmem:[#allocation5] sm:$0x3] %vm113, %v111
    // Predicated region
    $region14: #{tpu_custom_call.1} parent=1 // pred_check
      _
    $region15: #{tpu_custom_call.1} parent=1 // pred_check_branch
      %116 = sbr.rel (0) target = $region17
    $region16: #{tpu_custom_call.1} parent=1 // pred_region
      %s118 = ssub.s32 32, 32
      %119 = vsyncadd [#allocation4], %s118
      %s121 = sshll.u32 [#allocation5], 4
      %s122 = int_to_ptr.vmem [resolvable:$true] %s121
      %124 = dma.vmem_to_hbm [thread:$0]  %s122, 32, %s2, [#allocation4]
    $region17: #{tpu_custom_call.1} parent=1 // pred_fallthru
      _
    // Predicated region
    $region18: #{tpu_custom_call.1} parent=1 // pred_check
      _
    $region19: #{tpu_custom_call.1} parent=1 // pred_check_branch
      %126 = sbr.rel (0) target = $region21
    $region20: #{tpu_custom_call.1} parent=1 // pred_region
      %s128 = ssub.s32 32, 32
      %129 = vsyncadd [#allocation7], %s128
      %s131 = sshll.u32 [#allocation6], 4
      %s132 = int_to_ptr.vmem [resolvable:$true] %s131
      %134 = dma.vmem_to_hbm [thread:$0]  %s132, 32, %s3, [#allocation7]
    $region21: #{tpu_custom_call.1} parent=1 // pred_fallthru
      _
    // Predicated region
    $region22: #{tpu_custom_call.1} parent=1 // pred_check
      _
    $region23: #{tpu_custom_call.1} parent=1 // pred_check_branch
      %136 = sbr.rel (0) target = $region25
    $region24: #{tpu_custom_call.1} parent=1 // pred_region
      %137 = dma.done [#allocation4], 32
    $region25: #{tpu_custom_call.1} parent=1 // pred_fallthru
      _
    // Predicated region
    $region26: #{tpu_custom_call.1} parent=1 // pred_check
      _
    $region27: #{tpu_custom_call.1} parent=1 // pred_check_branch
      %139 = sbr.rel (0) target = $region29
    $region28: #{tpu_custom_call.1} parent=1 // pred_region
      %140 = dma.done [#allocation7], 32
    $region29: #{tpu_custom_call.1} parent=1 // pred_fallthru
      _
    %141 = vsyncpa [#allocation3], 1
    %142 = vsyncpa [#allocation4], 1
    %143 = vsyncpa [#allocation7], 1

</llo_original>
